<compile_context>
chip_gen: v7x
topology: tpu7x:2x2x1
jax: 0.10.0
libtpu: 0.0.40
codegen_flags: <defaults>
</compile_context>

<pallas_src>
import jax
import jax.numpy as jnp
from jax import lax
from jax.experimental import pallas as pl
from jax.experimental.pallas import tpu as pltpu


def _round_up(v, m):
    return -(-v // m) * m


def _cp_score_kernel(q_ref, rhs_ref, out_ref):
    # q_ref:   (TM, R)  fused query tile (lhs * rel)
    # rhs_ref: (TN, R)  untransposed tile of the rhs entity table
    # out_ref: (TM, TN) lane-dense score tile
    # Contract the shared last dim: (TM,R) x (TN,R) -> (TM,TN).  Any per-tile
    # relayout stays on-chip (XLU) and hides under the streaming DMA.
    out_ref[...] = lax.dot_general(
        q_ref[...],
        rhs_ref[...],
        dimension_numbers=(((1,), (1,)), ((), ())),
        preferred_element_type=jnp.float32,
    ).astype(out_ref.dtype)


def _vmem_budget_bytes():
    """~Half of physical VMEM (32 MiB on v7x, 64 MiB on v5e/v6e), clamped."""
    cap = 64 << 20
    try:
        info = pltpu.get_tpu_info()
        cap = int(getattr(info, "vmem_capacity_bytes", cap) or cap)
    except Exception:
        pass
    return int(min(max(cap // 2, 16 << 20), 80 << 20))


def _cp_scores(q, rhs_w):
    """(B, R) fused queries x (N2, R) entity table -> (B, N2) scores."""
    B, R = q.shape
    N2 = rhs_w.shape[0]

    # --- tile sizing --------------------------------------------------------
    tm = B if B <= 256 else 256            # batch tile (full-extent when small)
    R_pad = _round_up(R, 128)              # lane padding of R inside VMEM

    budget = _vmem_budget_bytes()
    # f32 words for pipeline buffers:
    #   2 x q tile (tm, R_pad) + 2 x rhs tile (tn, R_pad) + 2 x out tile (tm, tn)
    avail_words = budget // 4 - 2 * tm * R_pad
    tn = max(128, (avail_words // (2 * (R_pad + tm))) // 128 * 128)
    tn = min(tn, 8192)                     # diminishing returns beyond this

    n2_lane = _round_up(N2, 128)
    if tn >= N2:
        if n2_lane >= 2048:
            # Split the table so both TensorCores (v7x) get at least one tile.
            tn = _round_up(-(-n2_lane // 2), 128)
        else:
            tn = N2                        # single full-extent tile (legal)

    grid = (pl.cdiv(B, tm), pl.cdiv(N2, tn))

    # VMEM actually needed (+ headroom); well inside every generation's VMEM.
    need = 4 * (2 * tm * R_pad + 2 * tn * R_pad + 2 * tm * tn)
    vmem_limit = int(max(need + (4 << 20), 16 << 20))

    return pl.pallas_call(
        _cp_score_kernel,
        out_shape=jax.ShapeDtypeStruct((B, N2), jnp.float32),
        grid_spec=pltpu.PrefetchScalarGridSpec(
            num_scalar_prefetch=0,
            grid=grid,
            in_specs=[
                pl.BlockSpec((tm, R), lambda i, j: (i, 0)),   # q tile, resident over j
                pl.BlockSpec((tn, R), lambda i, j: (j, 0)),   # rhs tile (no transpose pass)
            ],
            out_specs=pl.BlockSpec((tm, tn), lambda i, j: (i, j)),
        ),
        compiler_params=pltpu.CompilerParams(
            dimension_semantics=("parallel", "parallel"),
            vmem_limit_bytes=vmem_limit,
        ),
        cost_estimate=pl.CostEstimate(
            flops=2 * B * R * N2,
            bytes_accessed=4 * (N2 * R + B * R + B * N2),
            transcendentals=0,
        ),
    )(q, rhs_w)


def cp_forward(x, lhs_w, rel_w, rhs_w):
    """Pallas implementation of CP.forward.

    x: (B, 3) int32 triples (lhs_idx, rel_idx, rhs_idx)
    *_w: embedding tables of shape (n, rank), float32
    Returns (scores, (lhs, rel, rhs)) matching the PyTorch module.
    """
    # Embedding gathers + elementwise product stay in plain JAX (XLA fuses the
    # multiply into the gather epilogue); the kernel streams the entity table.
    lhs = jnp.take(lhs_w, x[:, 0], axis=0)    # (B, R)
    rel = jnp.take(rel_w, x[:, 1], axis=0)    # (B, R)
    rhs = jnp.take(rhs_w, x[:, 2], axis=0)    # (B, R)
    q = lhs * rel                             # (B, R)

    scores = _cp_scores(q, rhs_w)             # (B, N2)
    return scores, (lhs, rel, rhs)


def cp_forward_ref(x, lhs_w, rel_w, rhs_w):
    """Pure-JAX reference for correctness checking."""
    lhs = jnp.take(lhs_w, x[:, 0], axis=0)
    rel = jnp.take(rel_w, x[:, 1], axis=0)
    rhs = jnp.take(rhs_w, x[:, 2], axis=0)
    return (lhs * rel) @ rhs_w.T, (lhs, rel, rhs)


if __name__ == "__main__":
    # Model config (small, consistent with CP.__init__): sizes = (n_lhs, n_rel, n_rhs)
    sizes = (64, 32, 300)   # non-multiple-of-128 rhs count exercises the masked tile path
    rank = 32
    init_size = 0.001
    batch = 8

    key = jax.random.PRNGKey(0)
    k_lhs, k_rel, k_rhs, k_x0, k_x1, k_x2 = jax.random.split(key, 6)

    # nn.Embedding default init is N(0, 1), then scaled by init_size.
    lhs_w = jax.random.normal(k_lhs, (sizes[0], rank), jnp.float32) * init_size
    rel_w = jax.random.normal(k_rel, (sizes[1], rank), jnp.float32) * init_size
    rhs_w = jax.random.normal(k_rhs, (sizes[2], rank), jnp.float32) * init_size

    # Deterministic query triples (lhs_idx, rel_idx, rhs_idx).
    x = jnp.stack(
        [
            jax.random.randint(k_x0, (batch,), 0, sizes[0]),
            jax.random.randint(k_x1, (batch,), 0, sizes[1]),
            jax.random.randint(k_x2, (batch,), 0, sizes[2]),
        ],
        axis=1,
    ).astype(jnp.int32)

    scores, (lhs, rel, rhs) = cp_forward(x, lhs_w, rel_w, rhs_w)
    jax.block_until_ready(scores)
    jax.block_until_ready(lhs)

    # Verify against the pure-JAX reference.
    scores_ref, (lhs_r, rel_r, rhs_r) = cp_forward_ref(x, lhs_w, rel_w, rhs_w)
    assert scores.shape == (batch, sizes[2])
    assert jnp.allclose(scores, scores_ref, atol=1e-6, rtol=1e-5)
    assert jnp.allclose(lhs, lhs_r) and jnp.allclose(rel, rel_r) and jnp.allclose(rhs, rhs_r)

    print("KERNEL_OK")
</pallas_src>

<mosaic_0001>
module attributes {stable_mosaic.version = 11 : i64} {
  func.func @_cp_score_kernel(%arg0: i32, %arg1: i32, %arg2: memref<8x32xf32, #tpu.memory_space<vmem>>, %arg3: memref<300x32xf32, #tpu.memory_space<vmem>>, %arg4: memref<8x300xf32, #tpu.memory_space<vmem>>) attributes {dimension_semantics = [#tpu.dimension_semantics<parallel>, #tpu.dimension_semantics<parallel>], iteration_bounds = array<i64: 1, 1>, scalar_prefetch = 0 : i64, scratch_operands = 0 : i64, tpu.core_type = #tpu.core_type<tc>, window_params = [{transform_indices = @transform_0, window_bounds = array<i64: 8, 32>}, {transform_indices = @transform_1, window_bounds = array<i64: 300, 32>}, {transform_indices = @transform_2, window_bounds = array<i64: 8, 300>}]} {
    %c0 = arith.constant 0 : index
    %c0_0 = arith.constant 0 : index
    %0 = vector.load %arg2[%c0, %c0_0] : memref<8x32xf32, #tpu.memory_space<vmem>>, vector<8x32xf32>
    %c0_1 = arith.constant 0 : index
    %c0_2 = arith.constant 0 : index
    %1 = vector.load %arg3[%c0_1, %c0_2] : memref<300x32xf32, #tpu.memory_space<vmem>>, vector<300x32xf32>
    %cst = arith.constant dense<0.000000e+00> : vector<8x300xf32>
    %2 = tpu.matmul %0, %1, %cst {dimension_numbers = #tpu.dot_dimension_numbers<[1], [1], [0], [0], [0, 0, 1, 0], [], []>} : vector<8x32xf32>, vector<300x32xf32>, vector<8x300xf32> -> vector<8x300xf32>
    %c0_3 = arith.constant 0 : index
    %c0_4 = arith.constant 0 : index
    %3 = vector.load %arg4[%c0_3, %c0_4] : memref<8x300xf32, #tpu.memory_space<vmem>>, vector<8x300xf32>
    tpu.vector_store %arg4[%c0_3, %c0_4], %2 {strides = array<i32>} : memref<8x300xf32, #tpu.memory_space<vmem>>, vector<8x300xf32>,
    return
  }
  func.func @transform_0(%arg0: i32, %arg1: i32) -> (i32, i32) {
    %c0_i32 = arith.constant 0 : i32
    %c0_i32_0 = arith.constant 0 : i32
    return %arg0, %c0_i32 : i32, i32
  }
  func.func @transform_1(%arg0: i32, %arg1: i32) -> (i32, i32) {
    %c0_i32 = arith.constant 0 : i32
    %c0_i32_0 = arith.constant 0 : i32
    return %arg1, %c0_i32 : i32, i32
  }
  func.func @transform_2(%arg0: i32, %arg1: i32) -> (i32, i32) {
    %c0_i32 = arith.constant 0 : i32
    return %arg0, %arg1 : i32, i32
  }
}

</mosaic_0001>

<llo_original>
// kernel: tpu_custom_call.1
$region0: #{tpu_custom_call.1}
  #allocation0 [shape = 'u32[]', space=smem, size = 0x4, offset = 0x4, fixed_abs, tag = 'smem constant byte address 0x4 - core index']
  #allocation1 [shape = 'u32[144,128]{1,0:T(1,128)}', space=vmem, size = 0x12000, scoped, tag = 'internal scratch']
  %s0 = inlined_call_operand.vmem [shape: f32[8,32], index: 0, kind: input, shape index: {}]
  %s1 = inlined_call_operand.vmem [shape: f32[300,32], index: 1, kind: input, shape index: {}]
  %s2 = inlined_call_operand.hbm [shape: f32[8,300], index: 2, kind: output, shape index: {}]
  %s3 = sld [smem:[#allocation0]]
  $region18: #{tpu_custom_call.1} parent=0
    _
  %s5 = ssub.s32 1, %s3
  %s6 = scalar_select 0, %s5, %s3
  $region1: #{tpu_custom_call.1} parent=0
    #allocation2 [shape = 'u8[12288]{0}', space=vmem, size = 0x3000, scoped, tag = 'output window, operand 0, single buffered']
    #allocation3 [shape = 's32[1]{0}', space=sflag, size = 0x4, scoped, tag = 'scoped memory for tpu_custom_call.1']
    %7 = vsyncpa [#allocation3], 0
    // Predicated region
    $region2: #{tpu_custom_call.1} parent=1 // pred_check
      _
    $region3: #{tpu_custom_call.1} parent=1 // pred_check_branch
      %9 = sbr.rel (0) target = $region5
    $region4: #{tpu_custom_call.1} parent=1 // pred_region
      _
    $region5: #{tpu_custom_call.1} parent=1 // pred_fallthru
      _
    // Predicated region
    $region6: #{tpu_custom_call.1} parent=1 // pred_check
      _
    $region7: #{tpu_custom_call.1} parent=1 // pred_check_branch
      %11 = sbr.rel (0) target = $region9
    $region8: #{tpu_custom_call.1} parent=1 // pred_region
      _
    $region9: #{tpu_custom_call.1} parent=1 // pred_fallthru
      _
    %v12 = vld [vmem:[%s0] sm:$0xff]
    %v13 = vld [vmem:[%s1] sm:$0xff]
    %v14 = vld [vmem:[%s1 + $0x8] sm:$0xff]
    %v15 = vld [vmem:[%s1 + $0x10] sm:$0xff]
    %v16 = vld [vmem:[%s1 + $0x18] sm:$0xff]
    %v17 = vld [vmem:[%s1 + $0x20] sm:$0xff]
    %v18 = vld [vmem:[%s1 + $0x28] sm:$0xff]
    %v19 = vld [vmem:[%s1 + $0x30] sm:$0xff]
    %v20 = vld [vmem:[%s1 + $0x38] sm:$0xff]
    %v21 = vld [vmem:[%s1 + $0x40] sm:$0xff]
    %v22 = vld [vmem:[%s1 + $0x48] sm:$0xff]
    %v23 = vld [vmem:[%s1 + $0x50] sm:$0xff]
    %v24 = vld [vmem:[%s1 + $0x58] sm:$0xff]
    %v25 = vld [vmem:[%s1 + $0x60] sm:$0xff]
    %v26 = vld [vmem:[%s1 + $0x68] sm:$0xff]
    %v27 = vld [vmem:[%s1 + $0x70] sm:$0xff]
    %v28 = vld [vmem:[%s1 + $0x78] sm:$0xff]
    %v29 = vld [vmem:[%s1 + $0x80] sm:$0xff]
    %v30 = vld [vmem:[%s1 + $0x88] sm:$0xff]
    %v31 = vld [vmem:[%s1 + $0x90] sm:$0xff]
    %v32 = vld [vmem:[%s1 + $0x98] sm:$0xff]
    %v33 = vld [vmem:[%s1 + $0xa0] sm:$0xff]
    %v34 = vld [vmem:[%s1 + $0xa8] sm:$0xff]
    %v35 = vld [vmem:[%s1 + $0xb0] sm:$0xff]
    %v36 = vld [vmem:[%s1 + $0xb8] sm:$0xff]
    %v37 = vld [vmem:[%s1 + $0xc0] sm:$0xff]
    %v38 = vld [vmem:[%s1 + $0xc8] sm:$0xff]
    %v39 = vld [vmem:[%s1 + $0xd0] sm:$0xff]
    %v40 = vld [vmem:[%s1 + $0xd8] sm:$0xff]
    %v41 = vld [vmem:[%s1 + $0xe0] sm:$0xff]
    %v42 = vld [vmem:[%s1 + $0xe8] sm:$0xff]
    %v43 = vld [vmem:[%s1 + $0xf0] sm:$0xff]
    %v44 = vld [vmem:[%s1 + $0xf8] sm:$0xff]
    %v45 = vld [vmem:[%s1 + $0x100] sm:$0xff]
    %v46 = vld [vmem:[%s1 + $0x108] sm:$0xff]
    %v47 = vld [vmem:[%s1 + $0x110] sm:$0xff]
    %v48 = vld [vmem:[%s1 + $0x118] sm:$0xff]
    %v49 = vld [vmem:[%s1 + $0x120] sm:$0xff]
    %v50 = vld [vmem:[%s1 + $0x128] sm:$0xf]
    %vm51 = vcmask 261120
    %v53 = vsel %vm51, %v12, 0
    %v56 = vsel %vm51, %v13, 0
    %v59 = vsel %vm51, %v14, 0
    %v62 = vsel %vm51, %v15, 0
    %v65 = vsel %vm51, %v16, 0
    %v68 = vsel %vm51, %v17, 0
    %v71 = vsel %vm51, %v18, 0
    %v74 = vsel %vm51, %v19, 0
    %v77 = vsel %vm51, %v20, 0
    %v80 = vsel %vm51, %v21, 0
    %v83 = vsel %vm51, %v22, 0
    %v86 = vsel %vm51, %v23, 0
    %v89 = vsel %vm51, %v24, 0
    %v92 = vsel %vm51, %v25, 0
    %v95 = vsel %vm51, %v26, 0
    %v98 = vsel %vm51, %v27, 0
    %v101 = vsel %vm51, %v28, 0
    %v104 = vsel %vm51, %v29, 0
    %v107 = vsel %vm51, %v30, 0
    %v110 = vsel %vm51, %v31, 0
    %v113 = vsel %vm51, %v32, 0
    %v116 = vsel %vm51, %v33, 0
    %v119 = vsel %vm51, %v34, 0
    %v122 = vsel %vm51, %v35, 0
    %v125 = vsel %vm51, %v36, 0
    %v128 = vsel %vm51, %v37, 0
    %v131 = vsel %vm51, %v38, 0
    %v134 = vsel %vm51, %v39, 0
    %v137 = vsel %vm51, %v40, 0
    %v140 = vsel %vm51, %v41, 0
    %v143 = vsel %vm51, %v42, 0
    %v146 = vsel %vm51, %v43, 0
    %v149 = vsel %vm51, %v44, 0
    %v152 = vsel %vm51, %v45, 0
    %v155 = vsel %vm51, %v46, 0
    %v158 = vsel %vm51, %v47, 0
    %v161 = vsel %vm51, %v48, 0
    %v164 = vsel %vm51, %v49, 0
    %v167 = vsel %vm51, %v50, 0
    %169 = vmatprep.subr.mxu0 0.0
    %170 = vmatpush1.xpose.msra.mxu0 %v56
    %171 = vmatprep.subr.mxu0 0.0
    %172 = vmatpush1.xpose.msra.mxu0 %v59
    %173 = vmatprep.subr.mxu0 0.0
    %174 = vmatpush1.xpose.msra.mxu0 %v62
    %175 = vmatprep.subr.mxu0 0.0
    %176 = vmatpush1.xpose.msra.mxu0 %v65
    %177 = vmatprep.subr.mxu0 0.0
    %178 = vmatpush1.xpose.msra.mxu0 %v68
    %179 = vmatprep.subr.mxu0 0.0
    %180 = vmatpush1.xpose.msra.mxu0 %v71
    %181 = vmatprep.subr.mxu0 0.0
    %182 = vmatpush1.xpose.msra.mxu0 %v74
    %183 = vmatprep.subr.mxu0 0.0
    %184 = vmatpush1.xpose.msra.mxu0 %v77
    %185 = vmatprep.subr.mxu0 0.0
    %186 = vmatpush1.xpose.msra.mxu0 %v80
    %187 = vmatprep.subr.mxu0 0.0
    %188 = vmatpush1.xpose.msra.mxu0 %v83
    %189 = vmatprep.subr.mxu0 0.0
    %190 = vmatpush1.xpose.msra.mxu0 %v86
    %191 = vmatprep.subr.mxu0 0.0
    %192 = vmatpush1.xpose.msra.mxu0 %v89
    %193 = vmatprep.subr.mxu0 0.0
    %194 = vmatpush1.xpose.msra.mxu0 %v92
    %195 = vmatprep.subr.mxu0 0.0
    %196 = vmatpush1.xpose.msra.mxu0 %v95
    %197 = vmatprep.subr.mxu0 0.0
    %198 = vmatpush1.xpose.msra.mxu0 %v98
    %199 = vmatprep.subr.mxu0 0.0
    %200 = vmatpush1.xpose.msra.mxu0 %v101
    %201 = vmatprep.subr.mxu0 0.0
    %202 = vmatpush1.xpose.msra.mxu0 %v104
    %203 = vmatprep.subr.mxu0 0.0
    %204 = vmatpush1.xpose.msra.mxu0 %v107
    %205 = vmatprep.subr.mxu0 0.0
    %206 = vmatpush1.xpose.msra.mxu0 %v110
    %207 = vmatprep.subr.mxu0 0.0
    %208 = vmatpush1.xpose.msra.mxu0 %v113
    %209 = vmatprep.subr.mxu0 0.0
    %210 = vmatpush1.xpose.msra.mxu0 %v116
    %211 = vmatprep.subr.mxu0 0.0
    %212 = vmatpush1.xpose.msra.mxu0 %v119
    %213 = vmatprep.subr.mxu0 0.0
    %214 = vmatpush1.xpose.msra.mxu0 %v122
    %215 = vmatprep.subr.mxu0 0.0
    %216 = vmatpush1.xpose.msra.mxu0 %v125
    %217 = vmatprep.subr.mxu0 0.0
    %218 = vmatpush1.xpose.msra.mxu0 %v128
    %219 = vmatprep.subr.mxu0 0.0
    %220 = vmatpush1.xpose.msra.mxu0 %v131
    %221 = vmatprep.subr.mxu0 0.0
    %222 = vmatpush1.xpose.msra.mxu0 %v134
    %223 = vmatprep.subr.mxu0 0.0
    %224 = vmatpush1.xpose.msra.mxu0 %v137
    %225 = vmatprep.subr.mxu0 0.0
    %226 = vmatpush1.xpose.msra.mxu0 %v140
    %227 = vmatprep.subr.mxu0 0.0
    %228 = vmatpush1.xpose.msra.mxu0 %v143
    %229 = vmatprep.subr.mxu0 0.0
    %230 = vmatpush1.xpose.msra.mxu0 %v146
    %231 = vmatprep.subr.mxu0 0.0
    %232 = vmatpush1.xpose.msra.mxu0 %v149
    %233 = vmatprep.mubr.f32.mxu0 0.0
    %234 = vmatmul.mubr.f32.gmra.mrb[0].mxu0 %v53
    %v235 = vpop.f32.mrb[0].mxu0
    %v236 = vadd.f32 0.0, %v235
    %v237 = vpop.f32.mrb[0].mxu0
    %v238 = vadd.f32 0.0, %v237
    %239 = vdwg.mxu0
    %240 = vmatprep.subr.mxu0 0.0
    %241 = vmatpush1.xpose.msra.mxu0 %v152
    %242 = vmatprep.subr.mxu0 0.0
    %243 = vmatpush1.xpose.msra.mxu0 %v155
    %244 = vmatprep.subr.mxu0 0.0
    %245 = vmatpush1.xpose.msra.mxu0 %v158
    %246 = vmatprep.subr.mxu0 0.0
    %247 = vmatpush1.xpose.msra.mxu0 %v161
    %248 = vmatprep.subr.mxu0 0.0
    %249 = vmatpush1.xpose.msra.mxu0 %v164
    %250 = vmatprep.subr.mxu0 0.0
    %251 = vmatpush1.xpose.msra.mxu0 %v167
    %252 = vmatprep.subr.mxu0 0.0
    %253 = vmatpush1.xpose.msra.mxu0 0.0
    %254 = vmatprep.subr.mxu0 0.0
    %255 = vmatpush1.xpose.msra.mxu0 0.0
    %256 = vmatprep.subr.mxu0 0.0
    %257 = vmatpush1.xpose.msra.mxu0 0.0
    %258 = vmatprep.subr.mxu0 0.0
    %259 = vmatpush1.xpose.msra.mxu0 0.0
    %260 = vmatprep.subr.mxu0 0.0
    %261 = vmatpush1.xpose.msra.mxu0 0.0
    %262 = vmatprep.subr.mxu0 0.0
    %263 = vmatpush1.xpose.msra.mxu0 0.0
    %264 = vmatprep.subr.mxu0 0.0
    %265 = vmatpush1.xpose.msra.mxu0 0.0
    %266 = vmatprep.subr.mxu0 0.0
    %267 = vmatpush1.xpose.msra.mxu0 0.0
    %268 = vmatprep.subr.mxu0 0.0
    %269 = vmatpush1.xpose.msra.mxu0 0.0
    %270 = vmatprep.subr.mxu0 0.0
    %271 = vmatpush1.xpose.msra.mxu0 0.0
    %272 = vmatprep.subr.mxu0 0.0
    %273 = vmatpush1.xpose.msra.mxu0 0.0
    %274 = vmatprep.subr.mxu0 0.0
    %275 = vmatpush1.xpose.msra.mxu0 0.0
    %276 = vmatprep.subr.mxu0 0.0
    %277 = vmatpush1.xpose.msra.mxu0 0.0
    %278 = vmatprep.subr.mxu0 0.0
    %279 = vmatpush1.xpose.msra.mxu0 0.0
    %280 = vmatprep.subr.mxu0 0.0
    %281 = vmatpush1.xpose.msra.mxu0 0.0
    %282 = vmatprep.subr.mxu0 0.0
    %283 = vmatpush1.xpose.msra.mxu0 0.0
    %284 = vmatprep.subr.mxu0 0.0
    %285 = vmatpush1.xpose.msra.mxu0 0.0
    %286 = vmatprep.subr.mxu0 0.0
    %287 = vmatpush1.xpose.msra.mxu0 0.0
    %288 = vmatprep.subr.mxu0 0.0
    %289 = vmatpush1.xpose.msra.mxu0 0.0
    %290 = vmatprep.subr.mxu0 0.0
    %291 = vmatpush1.xpose.msra.mxu0 0.0
    %292 = vmatprep.subr.mxu0 0.0
    %293 = vmatpush1.xpose.msra.mxu0 0.0
    %294 = vmatprep.subr.mxu0 0.0
    %295 = vmatpush1.xpose.msra.mxu0 0.0
    %296 = vmatprep.subr.mxu0 0.0
    %297 = vmatpush1.xpose.msra.mxu0 0.0
    %298 = vmatprep.subr.mxu0 0.0
    %299 = vmatpush1.xpose.msra.mxu0 0.0
    %300 = vmatprep.subr.mxu0 0.0
    %301 = vmatpush1.xpose.msra.mxu0 0.0
    %302 = vmatprep.subr.mxu0 0.0
    %303 = vmatpush1.xpose.msra.mxu0 0.0
    %304 = vmatprep.mubr.f32.mxu0 0.0
    %305 = vmatmul.mubr.f32.gmra.mrb[0].mxu0 %v53
    %v306 = vpop.f32.mrb[0].mxu0
    %v307 = vadd.f32 0.0, %v306
    %v308 = vpop.f32.mrb[0].mxu0
    %309 = vdwg.mxu0
    %310 = vst [vmem:[#allocation2] sm:$0xff] %v236
    %311 = vst [vmem:[#allocation2 + $0x8] sm:$0xff] %v238
    %vm312 = vcmask 359424
    %313 = vst.msk [vmem:[#allocation2 + $0x10] sm:$0xff] %vm312, %v307
    // Predicated region
    $region10: #{tpu_custom_call.1} parent=1 // pred_check
      _
    $region11: #{tpu_custom_call.1} parent=1 // pred_check_branch
      %315 = sbr.rel (0) target = $region13
    $region12: #{tpu_custom_call.1} parent=1 // pred_region
      %s317 = ssub.s32 384, 384
      %318 = vsyncadd [#allocation3], %s317
      %s320 = sshll.u32 [#allocation2], 4
      %s321 = int_to_ptr.vmem [resolvable:$true] %s320
      %323 = dma.vmem_to_hbm [thread:$0]  %s321, 384, %s2, [#allocation3]
    $region13: #{tpu_custom_call.1} parent=1 // pred_fallthru
      _
    // Predicated region
    $region14: #{tpu_custom_call.1} parent=1 // pred_check
      _
    $region15: #{tpu_custom_call.1} parent=1 // pred_check_branch
      %325 = sbr.rel (0) target = $region17
    $region16: #{tpu_custom_call.1} parent=1 // pred_region
      %326 = dma.done [#allocation3], 384
    $region17: #{tpu_custom_call.1} parent=1 // pred_fallthru
      _
    %327 = vsyncpa [#allocation3], 1

</llo_original>
